<compile_context>
chip_gen: v7x
topology: tpu7x:2x2x1
jax: 0.10.0
libtpu: 0.0.40
codegen_flags: <defaults>
</compile_context>

<pallas_src>
import functools
import math

import jax
import jax.numpy as jnp
from jax.experimental import pallas as pl
from jax.experimental.pallas import tpu as pltpu


def _pick_tile(dim: int, preferred: int, align: int) -> int:
    """Largest divisor of `dim` that is <= `preferred` and a multiple of
    `align`; falls back to the full dim (single block, always legal) if none
    exists.
    TODO(synk): for very large dims with no aligned divisor the fallback is a
    single huge block; pad the row dimension instead if that ever matters."""
    if dim <= preferred:
        return dim
    t = (preferred // align) * align
    while t >= align:
        if dim % t == 0:
            return t
        t -= align
    return dim


# ----------------------------------------------------------------------------
# Kernel 1: matmul + bias, full-K reduction  (QKV in-projection, bf16 MXU)
# ----------------------------------------------------------------------------
def _matmul_bias_kernel(x_ref, w_ref, b_ref, o_ref):
    acc = jnp.dot(x_ref[...], w_ref[...], preferred_element_type=jnp.float32)
    o_ref[...] = (acc + b_ref[...]).astype(o_ref.dtype)


def matmul_bias(x, w, b, *, tm=512, tn=768, out_dtype=jnp.bfloat16):
    """x: [M, K] (bf16) @ w: [K, N] (bf16) + b: [N] (f32) -> [M, N] out_dtype."""
    M, K = x.shape
    K2, N = w.shape
    assert K == K2
    tm = _pick_tile(M, tm, 16)   # bf16 sublane packing -> 16-row alignment
    tn = _pick_tile(N, tn, 128)
    grid = (M // tm, N // tn)
    return pl.pallas_call(
        _matmul_bias_kernel,
        grid=grid,
        in_specs=[
            pl.BlockSpec((tm, K), lambda i, j: (i, 0)),   # resident across j
            pl.BlockSpec((K, tn), lambda i, j: (0, j)),
            pl.BlockSpec((1, tn), lambda i, j: (0, j)),
        ],
        out_specs=pl.BlockSpec((tm, tn), lambda i, j: (i, j)),
        out_shape=jax.ShapeDtypeStruct((M, N), out_dtype),
        compiler_params=pltpu.CompilerParams(
            dimension_semantics=("parallel", "parallel")
        ),
    )(x, w, b.reshape(1, N))


# ----------------------------------------------------------------------------
# Kernel 2: multi-head attention
# ----------------------------------------------------------------------------
def _attn_heads(q_slab, k_slab, v_slab, m, head_dim):
    """q/k/v_slab: [S, W] bf16 with W = n_heads_in_slab * head_dim.
    m: [1, S] f32 additive mask.  Returns [S, W] f32."""
    n = q_slab.shape[-1] // head_dim
    outs = []
    for hh in range(n):
        sl = slice(hh * head_dim, (hh + 1) * head_dim)
        q = q_slab[:, sl]
        k = k_slab[:, sl]
        v = v_slab[:, sl]
        # Q @ K^T without materializing a transposed K tile (contract over d).
        s = jax.lax.dot_general(q, k, (((1,), (1,)), ((), ())),
                                preferred_element_type=jnp.float32)   # [S, S] f32
        s = s + m
        s = s - jnp.max(s, axis=-1, keepdims=True)
        p = jnp.exp(s)
        inv = pl.reciprocal(jnp.sum(p, axis=-1, keepdims=True), approx=True)
        p = (p * inv).astype(v.dtype)                                 # bf16 for MXU
        outs.append(jnp.dot(p, v, preferred_element_type=jnp.float32))
    return outs[0] if n == 1 else jnp.concatenate(outs, axis=-1)


def _attention_group_kernel(q_ref, k_ref, v_ref, mask_ref, o_ref, *, head_dim):
    # One (batch, head-group) per grid step; group width is a multiple of 128,
    # so the load and the single store below are lane-dense.
    m = mask_ref[0]                                          # [1, S] f32
    o_ref[0] = _attn_heads(q_ref[0], k_ref[0], v_ref[0], m,
                           head_dim).astype(o_ref.dtype)


def _attention_full_kernel(qkv_ref, mask_ref, o_ref, *, head_dim, hidden):
    # Fallback for small E (not a multiple of 128): whole batch element per step.
    m = mask_ref[0]                                          # [1, S] f32
    blk = qkv_ref[0]                                         # [S, 3E] bf16
    o_ref[0] = _attn_heads(blk[:, :hidden],
                           blk[:, hidden:2 * hidden],
                           blk[:, 2 * hidden:],
                           m, head_dim).astype(o_ref.dtype)


def multi_head_attention(qkv, mask_add, *, num_heads, out_dtype=jnp.bfloat16):
    """qkv: [B, S, 3E] bf16 (scale already folded into Q); mask_add: [B, 1, S] f32."""
    # TODO(synk): for S >= ~1k add a flash-style online-softmax with a KV grid
    # axis; the full [S, S] score tile does not fit VMEM at large S.
    B, S, three_e = qkv.shape
    E = three_e // 3
    d = E // num_heads

    if E % 128 == 0:
        # Head-group path: groups of heads whose combined width is a multiple
        # of 128 lanes (head pairs for d=64) -> lane-dense DMA + stores, small
        # live set of head temporaries, and (B, G) parallel grid points.
        gw = math.lcm(d, 128)
        if E % gw != 0:
            gw = E                      # still a multiple of 128
        G = E // gw
        eb = E // gw                    # number of gw-blocks per Q/K/V region
        kern = functools.partial(_attention_group_kernel, head_dim=d)
        return pl.pallas_call(
            kern,
            grid=(B, G),
            in_specs=[
                pl.BlockSpec((1, S, gw), lambda b, g: (b, 0, g)),            # Q slab
                pl.BlockSpec((1, S, gw), lambda b, g: (b, 0, eb + g)),       # K slab
                pl.BlockSpec((1, S, gw), lambda b, g: (b, 0, 2 * eb + g)),   # V slab
                pl.BlockSpec((1, 1, S), lambda b, g: (b, 0, 0)),
            ],
            out_specs=pl.BlockSpec((1, S, gw), lambda b, g: (b, 0, g)),
            out_shape=jax.ShapeDtypeStruct((B, S, E), out_dtype),
            compiler_params=pltpu.CompilerParams(
                dimension_semantics=("parallel", "parallel")
            ),
        )(qkv, qkv, qkv, mask_add)

    # Small-E fallback (unit-test shapes): one batch element per grid step.
    kern = functools.partial(_attention_full_kernel, head_dim=d, hidden=E)
    return pl.pallas_call(
        kern,
        grid=(B,),
        in_specs=[
            pl.BlockSpec((1, S, three_e), lambda b: (b, 0, 0)),
            pl.BlockSpec((1, 1, S), lambda b: (b, 0, 0)),
        ],
        out_specs=pl.BlockSpec((1, S, E), lambda b: (b, 0, 0)),
        out_shape=jax.ShapeDtypeStruct((B, S, E), out_dtype),
        compiler_params=pltpu.CompilerParams(
            dimension_semantics=("parallel",)
        ),
    )(qkv, mask_add)


# ----------------------------------------------------------------------------
# Kernel 3: fused out-projection + bias + residual + LayerNorm (eps = 1e-12)
#           Full-K, 1-D grid; the [E, E] weight stays resident in VMEM.
# ----------------------------------------------------------------------------
def _outproj_residual_ln_kernel(x_ref, w_ref, b_ref, res_ref, g_ref, beta_ref,
                                o_ref, *, eps):
    y = jnp.dot(x_ref[...], w_ref[...], preferred_element_type=jnp.float32)
    y = y + b_ref[...] + res_ref[...]
    mean = jnp.mean(y, axis=-1, keepdims=True)
    var = jnp.mean((y - mean) ** 2, axis=-1, keepdims=True)
    o_ref[...] = ((y - mean) * jax.lax.rsqrt(var + eps) * g_ref[...]
                  + beta_ref[...]).astype(o_ref.dtype)


def out_proj_residual_layernorm(ctx, w, b, residual, gamma, beta,
                                *, eps=1e-12, tm=256):
    """(ctx @ w + b + residual) -> LayerNorm, one pass over HBM."""
    M, K = ctx.shape
    K2, E = w.shape
    assert K == K2
    tm = _pick_tile(M, tm, 8)
    grid = (M // tm,)
    kern = functools.partial(_outproj_residual_ln_kernel, eps=eps)
    return pl.pallas_call(
        kern,
        grid=grid,
        in_specs=[
            pl.BlockSpec((tm, K), lambda i: (i, 0)),
            pl.BlockSpec((K, E), lambda i: (0, 0)),     # resident weight
            pl.BlockSpec((1, E), lambda i: (0, 0)),
            pl.BlockSpec((tm, E), lambda i: (i, 0)),
            pl.BlockSpec((1, E), lambda i: (0, 0)),
            pl.BlockSpec((1, E), lambda i: (0, 0)),
        ],
        out_specs=pl.BlockSpec((tm, E), lambda i: (i, 0)),
        out_shape=jax.ShapeDtypeStruct((M, E), jnp.float32),
        compiler_params=pltpu.CompilerParams(
            dimension_semantics=("parallel",)
        ),
    )(ctx, w, b.reshape(1, E), residual, gamma.reshape(1, E), beta.reshape(1, E))


# ----------------------------------------------------------------------------
# Parameter prep + forward pass
# ----------------------------------------------------------------------------
def init_params(key, hidden_size, num_heads):
    """PyTorch-convention parameters (in_proj_weight: [3E, E], out_proj: [E, E])."""
    k1, k2, k3, k4 = jax.random.split(key, 4)
    std = 0.02
    return {
        "num_heads": num_heads,
        "in_proj_weight": std * jax.random.normal(
            k1, (3 * hidden_size, hidden_size), jnp.float32),
        "in_proj_bias": std * jax.random.normal(k2, (3 * hidden_size,), jnp.float32),
        "out_proj_weight": std * jax.random.normal(
            k3, (hidden_size, hidden_size), jnp.float32),
        "out_proj_bias": std * jax.random.normal(k4, (hidden_size,), jnp.float32),
        "ln_gamma": jnp.ones((hidden_size,), jnp.float32),
        "ln_beta": jnp.zeros((hidden_size,), jnp.float32),
    }


def prepare_params(params):
    """One-time prep: pre-transpose weights, fold the 1/sqrt(head_dim) attention
    scale into the Q portion of the in-projection, cast weights to bf16 for the
    MXU (biases / LN params stay f32)."""
    E = params["out_proj_weight"].shape[0]
    H = params["num_heads"]
    d = E // H
    scale = 1.0 / (d ** 0.5)
    w_in = params["in_proj_weight"].T                    # [E, 3E]
    b_in = params["in_proj_bias"]                        # [3E]
    w_in = w_in.at[:, :E].multiply(scale)
    b_in = b_in.at[:E].multiply(scale)
    return {
        "num_heads": H,
        "w_in": w_in.astype(jnp.bfloat16),
        "b_in": b_in.astype(jnp.float32),
        "w_out": params["out_proj_weight"].T.astype(jnp.bfloat16),   # [E, E]
        "b_out": params["out_proj_bias"].astype(jnp.float32),
        "ln_gamma": params["ln_gamma"].astype(jnp.float32),
        "ln_beta": params["ln_beta"].astype(jnp.float32),
    }


def bert_attention_forward(prepared, hidden_states, attention_mask=None):
    """
    hidden_states : [S, B, E] float32
    attention_mask: [B, S] bool, True = padding (masked key). Optional.
    returns       : [S, B, E] float32
    """
    S, B, E = hidden_states.shape
    H = prepared["num_heads"]

    # Batch-major rows so each batch's block is contiguous; the only layout
    # shuffles in the whole forward are this transpose and its inverse.
    x_bse = jnp.transpose(hidden_states, (1, 0, 2))       # [B, S, E]
    x_flat = x_bse.reshape(B * S, E)                      # f32 (residual / LN path)
    x_bf16 = x_flat.astype(jnp.bfloat16)                  # MXU input

    # --- fused QKV projection (scale folded into Q weights), bf16 out ---
    qkv = matmul_bias(x_bf16, prepared["w_in"], prepared["b_in"])   # [B*S, 3E] bf16
    qkv = qkv.reshape(B, S, 3 * E)

    # --- key padding mask -> additive mask [B, 1, S] (large finite negative, f32) ---
    if attention_mask is None:
        mask_add = jnp.zeros((B, 1, S), jnp.float32)
    else:
        mask_add = jnp.where(attention_mask, -1e30, 0.0).astype(jnp.float32)
        mask_add = mask_add.reshape(B, 1, S)

    # --- multi-head attention (head-group tiled when E % 128 == 0), bf16 out ---
    ctx = multi_head_attention(qkv, mask_add, num_heads=H)          # [B, S, E] bf16
    ctx = ctx.reshape(B * S, E)

    # --- fused out-projection + residual + LayerNorm (dropout = identity) ---
    out = out_proj_residual_layernorm(
        ctx, prepared["w_out"], prepared["b_out"], x_flat,
        prepared["ln_gamma"], prepared["ln_beta"], eps=1e-12)       # [B*S, E] f32

    return jnp.transpose(out.reshape(B, S, E), (1, 0, 2))           # [S, B, E]


if __name__ == "__main__":
    SRC_LEN, BATCH, HIDDEN, HEADS = 8, 2, 32, 4

    key = jax.random.PRNGKey(0)
    kp, kx = jax.random.split(key)
    params = init_params(kp, HIDDEN, HEADS)
    prepared = prepare_params(params)

    hidden_states = jax.random.normal(kx, (SRC_LEN, BATCH, HIDDEN), jnp.float32)
    # key_padding_mask: [batch, src_len]; True = padded. Batch 1 pads last 2 tokens.
    attention_mask = jnp.array(
        [[False] * SRC_LEN,
         [False] * (SRC_LEN - 2) + [True] * 2],
        dtype=bool,
    )

    out = bert_attention_forward(prepared, hidden_states, attention_mask)
    jax.block_until_ready(out)
    assert out.shape == (SRC_LEN, BATCH, HIDDEN)
    assert bool(jnp.all(jnp.isfinite(out)))
    print("KERNEL_OK")
</pallas_src>

<mosaic_0001>
module attributes {stable_mosaic.version = 11 : i64} {
  func.func @_matmul_bias_kernel(%arg0: i32, %arg1: i32, %arg2: memref<16x32xbf16, #tpu.memory_space<vmem>>, %arg3: memref<32x96xbf16, #tpu.memory_space<vmem>>, %arg4: memref<1x96xf32, #tpu.memory_space<vmem>>, %arg5: memref<16x96xbf16, #tpu.memory_space<vmem>>) attributes {dimension_semantics = [#tpu.dimension_semantics<parallel>, #tpu.dimension_semantics<parallel>], iteration_bounds = array<i64: 1, 1>, scalar_prefetch = 0 : i64, scratch_operands = 0 : i64, tpu.core_type = #tpu.core_type<tc>, window_params = [{transform_indices = @transform_0, window_bounds = array<i64: 16, 32>}, {transform_indices = @transform_1, window_bounds = array<i64: 32, 96>}, {transform_indices = @transform_2, window_bounds = array<i64: 1, 96>}, {transform_indices = @transform_3, window_bounds = array<i64: 16, 96>}]} {
    %c0 = arith.constant 0 : index
    %c0_0 = arith.constant 0 : index
    %0 = vector.load %arg2[%c0, %c0_0] : memref<16x32xbf16, #tpu.memory_space<vmem>>, vector<16x32xbf16>
    %c0_1 = arith.constant 0 : index
    %c0_2 = arith.constant 0 : index
    %1 = vector.load %arg3[%c0_1, %c0_2] : memref<32x96xbf16, #tpu.memory_space<vmem>>, vector<32x96xbf16>
    %cst = arith.constant dense<0.000000e+00> : vector<16x96xf32>
    %2 = tpu.matmul %0, %1, %cst {dimension_numbers = #tpu.dot_dimension_numbers<[1], [0], [0], [1], [0, 0, 1, 1], [], []>} : vector<16x32xbf16>, vector<32x96xbf16>, vector<16x96xf32> -> vector<16x96xf32>
    %c0_3 = arith.constant 0 : index
    %c0_4 = arith.constant 0 : index
    %3 = vector.load %arg4[%c0_3, %c0_4] : memref<1x96xf32, #tpu.memory_space<vmem>>, vector<1x96xf32>
    %4 = vector.broadcast %3 : vector<1x96xf32> to vector<16x96xf32>
    %5 = arith.addf %2, %4 : vector<16x96xf32>
    %6 = arith.truncf %5 : vector<16x96xf32> to vector<16x96xbf16>
    %c0_5 = arith.constant 0 : index
    %c0_6 = arith.constant 0 : index
    %7 = vector.load %arg5[%c0_5, %c0_6] : memref<16x96xbf16, #tpu.memory_space<vmem>>, vector<16x96xbf16>
    tpu.vector_store %arg5[%c0_5, %c0_6], %6 {strides = array<i32>} : memref<16x96xbf16, #tpu.memory_space<vmem>>, vector<16x96xbf16>,
    return
  }
  func.func @transform_0(%arg0: i32, %arg1: i32) -> (i32, i32) {
    %c0_i32 = arith.constant 0 : i32
    %c0_i32_0 = arith.constant 0 : i32
    return %arg0, %c0_i32 : i32, i32
  }
  func.func @transform_1(%arg0: i32, %arg1: i32) -> (i32, i32) {
    %c0_i32 = arith.constant 0 : i32
    %c0_i32_0 = arith.constant 0 : i32
    return %c0_i32, %arg1 : i32, i32
  }
  func.func @transform_2(%arg0: i32, %arg1: i32) -> (i32, i32) {
    %c0_i32 = arith.constant 0 : i32
    %c0_i32_0 = arith.constant 0 : i32
    return %c0_i32, %arg1 : i32, i32
  }
  func.func @transform_3(%arg0: i32, %arg1: i32) -> (i32, i32) {
    %c0_i32 = arith.constant 0 : i32
    return %arg0, %arg1 : i32, i32
  }
}

</mosaic_0001>

<llo_original>
// kernel: tpu_custom_call.1
$region0: #{tpu_custom_call.1}
  #allocation0 [shape = 'u32[]', space=smem, size = 0x4, offset = 0x4, fixed_abs, tag = 'smem constant byte address 0x4 - core index']
  #allocation1 [shape = 'u32[144,128]{1,0:T(1,128)}', space=vmem, size = 0x12000, scoped, tag = 'internal scratch']
  %s0 = inlined_call_operand.hbm [shape: bf16[16,32], index: 0, kind: input, shape index: {}]
  %s1 = inlined_call_operand.hbm [shape: bf16[32,96], index: 1, kind: input, shape index: {}]
  %s2 = inlined_call_operand.vmem [shape: f32[1,96], index: 2, kind: input, shape index: {}]
  %s3 = inlined_call_operand.hbm [shape: bf16[16,96], index: 3, kind: output, shape index: {}]
  %s4 = sld [smem:[#allocation0]]
  $region30: #{tpu_custom_call.1} parent=0
    _
  %s6 = ssub.s32 1, %s4
  %s7 = scalar_select 0, %s6, %s4
  $region1: #{tpu_custom_call.1} parent=0
    #allocation2 [shape = 'u8[4096]{0}', space=vmem, size = 0x1000, scoped, tag = 'input window, operand 0, single buffered']
    #allocation3 [shape = 's32[1]{0}', space=sflag, size = 0x4, scoped, tag = 'scoped memory for tpu_custom_call.1']
    #allocation4 [shape = 's32[1]{0}', space=sflag, size = 0x4, scoped, tag = 'scoped memory for tpu_custom_call.1']
    #allocation5 [shape = 'u8[8192]{0}', space=vmem, size = 0x2000, scoped, tag = 'input window, operand 1, single buffered']
    #allocation6 [shape = 's32[1]{0}', space=sflag, size = 0x4, scoped, tag = 'scoped memory for tpu_custom_call.1']
    #allocation7 [shape = 'u8[4096]{0}', space=vmem, size = 0x1000, scoped, tag = 'output window, operand 0, single buffered']
    %8 = vsyncpa [#allocation3], 0
    %9 = vsyncpa [#allocation6], 0
    %10 = vsyncpa [#allocation4], 0
    // Predicated region
    $region2: #{tpu_custom_call.1} parent=1 // pred_check
      _
    $region3: #{tpu_custom_call.1} parent=1 // pred_check_branch
      %12 = sbr.rel (0) target = $region5
    $region4: #{tpu_custom_call.1} parent=1 // pred_region
      %s14 = ssub.s32 128, 128
      %15 = vsyncadd [#allocation3], %s14
      %s16 = sshll.u32 [#allocation2], 4
      %s17 = int_to_ptr.vmem [resolvable:$true] %s16
      %22 = dma.hbm_to_vmem [thread:$0]  %s0, 128, %s17, [#allocation3], 64, 64, 4
    $region5: #{tpu_custom_call.1} parent=1 // pred_fallthru
      _
    // Predicated region
    $region6: #{tpu_custom_call.1} parent=1 // pred_check
      _
    $region7: #{tpu_custom_call.1} parent=1 // pred_check_branch
      %24 = sbr.rel (0) target = $region9
    $region8: #{tpu_custom_call.1} parent=1 // pred_region
      %s26 = ssub.s32 256, 256
      %27 = vsyncadd [#allocation6], %s26
      %s28 = sshll.u32 [#allocation5], 4
      %s29 = int_to_ptr.vmem [resolvable:$true] %s28
      %34 = dma.hbm_to_vmem [thread:$0]  %s1, 256, %s29, [#allocation6], 64, 64, 4
    $region9: #{tpu_custom_call.1} parent=1 // pred_fallthru
      _
    // Predicated region
    $region10: #{tpu_custom_call.1} parent=1 // pred_check
      _
    $region11: #{tpu_custom_call.1} parent=1 // pred_check_branch
      %36 = sbr.rel (0) target = $region13
    $region12: #{tpu_custom_call.1} parent=1 // pred_region
      _
    $region13: #{tpu_custom_call.1} parent=1 // pred_fallthru
      _
    // Predicated region
    $region14: #{tpu_custom_call.1} parent=1 // pred_check
      _
    $region15: #{tpu_custom_call.1} parent=1 // pred_check_branch
      %38 = sbr.rel (0) target = $region17
    $region16: #{tpu_custom_call.1} parent=1 // pred_region
      %39 = dma.done [#allocation3], 128
    $region17: #{tpu_custom_call.1} parent=1 // pred_fallthru
      _
    // Predicated region
    $region18: #{tpu_custom_call.1} parent=1 // pred_check
      _
    $region19: #{tpu_custom_call.1} parent=1 // pred_check_branch
      %41 = sbr.rel (0) target = $region21
    $region20: #{tpu_custom_call.1} parent=1 // pred_region
      %42 = dma.done [#allocation6], 256
    $region21: #{tpu_custom_call.1} parent=1 // pred_fallthru
      _
    %v44 = vld [vmem:[#allocation2] sm:$0xf]
    %v45 = vld [vmem:[#allocation2 + $0x4] sm:$0xf]
    %v46 = vld [vmem:[#allocation5] sm:$0xf]
    %v47 = vld [vmem:[#allocation5 + $0x4] sm:$0xf]
    %v48 = vld [vmem:[#allocation5 + $0x8] sm:$0xf]
    %v49 = vld [vmem:[#allocation5 + $0xc] sm:$0xf]
    %v50 = vld [vmem:[%s2] sm:$0x1]
    %v52 = vlaneseq
    %v53 = vshrl.u32 %v52, 7
    %v54 = vsub.s32 0, %v53
    %v55 = vrot.slane %v50, %v54
    %v59 = vunpack.c.l.b16 %v44
    %v60 = vunpack.c.l.b16 %v45
    %v61 = vpack.c.b16 %v60, %v59
    %v66 = vunpack.c.l.b16 %v46
    %v67 = vunpack.c.l.b16 %v47
    %v68 = vunpack.c.l.b16 %v48
    %v69 = vunpack.c.l.b16 %v49
    %v70 = vpack.c.b16 %v67, %v66
    %v71 = vpack.c.b16 %v69, %v68
    %vm74 = vcmask 261120
    %v76 = vsel %vm74, %v61, 0
    %78 = vmatprep.subr.bf16.mxu0 0
    %79 = vmatpush1.bf16.msra.mxu0 %v70
    %80 = vmatprep.subr.bf16.mxu0 0
    %81 = vmatpush1.bf16.msra.mxu0 %v71
    %82 = vmatprep.subr.bf16.mxu0 0
    %83 = vmatpush1.bf16.msra.mxu0 0
    %84 = vmatprep.subr.bf16.mxu0 0
    %85 = vmatpush1.bf16.msra.mxu0 0
    %86 = vmatprep.subr.bf16.mxu0 0
    %87 = vmatpush1.bf16.msra.mxu0 0
    %88 = vmatprep.subr.bf16.mxu0 0
    %89 = vmatpush1.bf16.msra.mxu0 0
    %90 = vmatprep.subr.bf16.mxu0 0
    %91 = vmatpush1.bf16.msra.mxu0 0
    %92 = vmatprep.subr.bf16.mxu0 0
    %93 = vmatpush1.bf16.msra.mxu0 0
    %94 = vmatprep.subr.bf16.mxu0 0
    %95 = vmatpush1.bf16.msra.mxu0 0
    %96 = vmatprep.subr.bf16.mxu0 0
    %97 = vmatpush1.bf16.msra.mxu0 0
    %98 = vmatprep.subr.bf16.mxu0 0
    %99 = vmatpush1.bf16.msra.mxu0 0
    %100 = vmatprep.subr.bf16.mxu0 0
    %101 = vmatpush1.bf16.msra.mxu0 0
    %102 = vmatprep.subr.bf16.mxu0 0
    %103 = vmatpush1.bf16.msra.mxu0 0
    %104 = vmatprep.subr.bf16.mxu0 0
    %105 = vmatpush1.bf16.msra.mxu0 0
    %106 = vmatprep.subr.bf16.mxu0 0
    %107 = vmatpush1.bf16.msra.mxu0 0
    %108 = vmatprep.subr.bf16.mxu0 0
    %109 = vmatpush1.bf16.msra.mxu0 0
    %110 = vmatprep.mubr.bf16.mxu0 0
    %111 = vmatmul.mubr.bf16.gmra.mrb[0].mxu0 %v76
    %v112 = vpop.f32.mrb[0].mxu0
    %v113 = vadd.f32 %v55, %v112
    %v114 = vpop.f32.mrb[0].mxu0
    %v115 = vpop.f32.mrb[0].mxu0
    %v116 = vadd.f32 %v55, %v115
    %v117 = vpop.f32.mrb[0].mxu0
    %118 = vdwg.mxu0
    %v119 = vpack.c.bf16 %v116, %v113
    %v121 = vunpack.c.l.b16 %v119
    %v122 = vunpack.c.h.b16 %v119
    %v123 = vpack.c.b16 %v121, %v121
    %v124 = vpack.c.b16 %v122, %v122
    %vm127 = vcmask 781312
    %128 = vst.msk [vmem:[#allocation7] sm:$0xf] %vm127, %v123
    %129 = vst.msk [vmem:[#allocation7 + $0x4] sm:$0xf] %vm127, %v124
    // Predicated region
    $region22: #{tpu_custom_call.1} parent=1 // pred_check
      _
    $region23: #{tpu_custom_call.1} parent=1 // pred_check_branch
      %131 = sbr.rel (0) target = $region25
    $region24: #{tpu_custom_call.1} parent=1 // pred_region
      %s133 = ssub.s32 128, 128
      %134 = vsyncadd [#allocation4], %s133
      %s135 = sshll.u32 [#allocation7], 4
      %s136 = int_to_ptr.vmem [resolvable:$true] %s135
      %141 = dma.vmem_to_hbm [thread:$0]  %s136, 128, %s3, [#allocation4], 64, 64, 4
    $region25: #{tpu_custom_call.1} parent=1 // pred_fallthru
      _
    // Predicated region
    $region26: #{tpu_custom_call.1} parent=1 // pred_check
      _
    $region27: #{tpu_custom_call.1} parent=1 // pred_check_branch
      %143 = sbr.rel (0) target = $region29
    $region28: #{tpu_custom_call.1} parent=1 // pred_region
      %144 = dma.done [#allocation4], 128
    $region29: #{tpu_custom_call.1} parent=1 // pred_fallthru
      _
    %145 = vsyncpa [#allocation3], 1
    %146 = vsyncpa [#allocation6], 1
    %147 = vsyncpa [#allocation4], 1

</llo_original>
